<compile_context>
chip_gen: v5e
topology: v5e:2x2
jax: 0.10.0
libtpu: 0.0.40
codegen_flags: <defaults>
</compile_context>

<pallas_src>
import functools
import math

import jax
import jax.numpy as jnp
from jax.experimental import pallas as pl
from jax.experimental.pallas import tpu as pltpu


def _round_up(x, m):
    return (x + m - 1) // m * m


# ---------------------------------------------------------------------------
# Kernel A: fused projection matmul (bf16 operands, f32 accumulation)
# ---------------------------------------------------------------------------
def _proj_matmul_kernel(x_ref, w_ref, o_ref):
    o_ref[...] = jnp.dot(x_ref[...], w_ref[...],
                         preferred_element_type=jnp.float32)


def fused_projection(x_bf16, w_bf16):
    """[M, K] @ [K, Nout] -> [M, Nout] f32, tiled over row blocks."""
    M, Kdim = x_bf16.shape
    _, Nout = w_bf16.shape
    TM = 256 if M >= 256 else _round_up(M, 8)
    Mp = _round_up(M, TM)
    if Mp != M:
        x_bf16 = jnp.zeros((Mp, Kdim), x_bf16.dtype).at[:M].set(x_bf16)
    out = pl.pallas_call(
        _proj_matmul_kernel,
        out_shape=jax.ShapeDtypeStruct((Mp, Nout), jnp.float32),
        grid=(Mp // TM,),
        in_specs=[pl.BlockSpec((TM, Kdim), lambda i: (i, 0)),
                  pl.BlockSpec((Kdim, Nout), lambda i: (0, 0))],
        out_specs=pl.BlockSpec((TM, Nout), lambda i: (i, 0)),
        compiler_params=pltpu.CompilerParams(
            dimension_semantics=("parallel",)),
    )(x_bf16, w_bf16)
    return out[:M]


# ---------------------------------------------------------------------------
# Kernel B: attention over padded neighbour slots + aggregation + LN/MLP/LN
# ---------------------------------------------------------------------------
def _graph_attn_kernel(hcat_ref, u_nk_ref, ecat_ref, mask_ref,
                       mlp_w1_ref, mlp_b1_ref, mlp_w2_ref, mlp_b2_ref,
                       gamma_ref, beta_ref, out_ref, *, H, K, eps):
    BIG = jnp.float32(1e30)

    v_n = hcat_ref[:, 1 * H:2 * H]          # [NB, H]
    k_n = hcat_ref[:, 2 * H:3 * H]
    h6 = hcat_ref[:, 3 * H:4 * H]

    def slot_logit(s):
        """Masked attention logit for neighbour slot s (recomputed in pass 2
        to keep only O(1) live [NB,H] tiles)."""
        u_s = u_nk_ref[:, s * H:(s + 1) * H]
        x3_s = ecat_ref[:, s * 2 * H: s * 2 * H + H]
        msk = mask_ref[:, s:s + 1]                     # [NB, 1] lane-broadcast
        a = u_s * (v_n + x3_s)                         # 1/sqrt(D) folded in w1
        a = a * msk - (1.0 - msk) * BIG                # -1e30 on padding slots
        return a, msk

    # pass 1: per-destination-node max over incoming edges (numerical stability)
    m = jnp.full_like(v_n, -BIG)
    for s in range(K):
        a, _ = slot_logit(s)
        m = jnp.maximum(m, a)

    # pass 2: exp / denominator / weighted message aggregation
    denom = jnp.zeros_like(v_n)
    agg = jnp.zeros_like(v_n)
    for s in range(K):
        a, msk = slot_logit(s)
        x5_s = ecat_ref[:, s * 2 * H + H:(s + 1) * 2 * H]
        ex = jnp.exp(a - m) * msk
        denom = denom + ex
        agg = agg + ex * (k_n + x5_s)

    # node-level reciprocal of the softmax denominator (one divide per node,
    # not per edge); guard zero-in-degree nodes.
    r = pl.reciprocal(jnp.maximum(denom, jnp.float32(1e-30)), approx=False)
    h = h6 + agg * r

    gamma = gamma_ref[...]
    beta = beta_ref[...]

    def layernorm(x):
        mu = jnp.mean(x, axis=-1, keepdims=True)
        var = jnp.mean((x - mu) ** 2, axis=-1, keepdims=True)
        return (x - mu) * jax.lax.rsqrt(var + eps) * gamma + beta

    h = layernorm(h)
    # MLP residual (hidden -> 2*hidden -> hidden, ReLU), bf16 MXU operands
    h1 = jnp.dot(h.astype(jnp.bfloat16), mlp_w1_ref[...],
                 preferred_element_type=jnp.float32) + mlp_b1_ref[...]
    h1 = jnp.maximum(h1, 0.0)
    h2 = jnp.dot(h1.astype(jnp.bfloat16), mlp_w2_ref[...],
                 preferred_element_type=jnp.float32) + mlp_b2_ref[...]
    h = layernorm(h + h2)
    # dropout(training=False) == identity
    # TODO(synk): for hidden < 128 the [NB, H] output store is lane-masked;
    # real deployments should use hidden >= 128 (or pack nodes per vreg row).
    out_ref[...] = h


# ---------------------------------------------------------------------------
# Host-side preparation
# ---------------------------------------------------------------------------
def prepare_params(params, num_heads):
    """Concatenate weights (2 fused matmuls), fold 1/sqrt(D) into w1, cast
    MXU operands to bf16."""
    H = params["w1t"].shape[0]
    D = H // num_heads
    scale = jnp.float32(1.0 / math.sqrt(D))
    w_h_cat = jnp.concatenate(
        [params["w1t"] * scale, params["w2t"], params["w4t"], params["w6t"]],
        axis=1).astype(jnp.bfloat16)                                  # [H, 4H]
    w_e_cat = jnp.concatenate(
        [params["w3t"], params["w5t"]], axis=1).astype(jnp.bfloat16)  # [H, 2H]
    return {
        "w_h_cat": w_h_cat,
        "w_e_cat": w_e_cat,
        "mlp_w1": params["mlp_w1t"].astype(jnp.bfloat16),
        "mlp_b1": params["mlp_b1"].astype(jnp.float32),
        "mlp_w2": params["mlp_w2t"].astype(jnp.bfloat16),
        "mlp_b2": params["mlp_b2"].astype(jnp.float32),
        "gamma": params["gamma"].astype(jnp.float32),
        "beta": params["beta"].astype(jnp.float32),
    }


def _build_neighbor_tables(src, dst, N, N_pad, E):
    """Padded incoming-neighbour lists (CSR by destination, fixed width K)."""
    order = jnp.argsort(dst)
    dst_s = dst[order]
    src_s = src[order]
    start = jnp.searchsorted(dst_s, jnp.arange(N), side="left")
    end = jnp.searchsorted(dst_s, jnp.arange(N), side="right")
    deg_max = int(jnp.max(end - start)) if E > 0 else 0
    K = _round_up(max(deg_max, 1), 8)       # static max in-degree (padded)
    rank = jnp.arange(E) - start[dst_s]     # position within own dst group
    edge_idx = jnp.full((N_pad, K), E, jnp.int32).at[dst_s, rank].set(
        order.astype(jnp.int32))
    src_idx = jnp.zeros((N_pad, K), jnp.int32).at[dst_s, rank].set(
        src_s.astype(jnp.int32))
    mask = jnp.zeros((N_pad, K), jnp.float32).at[dst_s, rank].set(1.0)
    return edge_idx, src_idx, mask, K


def graph_attention_pallas(h0, e_ij, src, dst, params, *, num_heads, eps=1e-5):
    N, H = h0.shape
    E = int(e_ij.shape[0])
    prep = prepare_params(params, num_heads)

    NB = 128 if N >= 128 else _round_up(N, 8)      # node block (parallel axis)
    N_pad = _round_up(N, NB)

    edge_idx, src_idx, mask, K = _build_neighbor_tables(src, dst, N, N_pad, E)

    # --- fused projections: 2 matmuls instead of 6, bf16 operands ---
    h0_pad = jnp.zeros((N_pad, H), jnp.float32).at[:N].set(h0)
    hcat = fused_projection(h0_pad.astype(jnp.bfloat16),
                            prep["w_h_cat"])               # [N_pad, 4H] = u|v|k|h6

    e_rows = jnp.concatenate([e_ij, jnp.zeros((1, H), e_ij.dtype)], axis=0)
    e_nk = e_rows[edge_idx.reshape(-1)]                    # [N_pad*K, H] (XLA gather)
    ecat = fused_projection(e_nk.astype(jnp.bfloat16),
                            prep["w_e_cat"])               # [N_pad*K, 2H] = x3|x5
    ecat = ecat.reshape(N_pad, K * 2 * H)

    # gather projected u rows to neighbour slots (replaces the [E,N] one-hot matmul)
    u_nk = hcat[:, :H][src_idx.reshape(-1)].reshape(N_pad, K * H)

    kernel = functools.partial(_graph_attn_kernel, H=H, K=K, eps=eps)
    out = pl.pallas_call(
        kernel,
        out_shape=jax.ShapeDtypeStruct((N_pad, H), jnp.float32),
        grid=(N_pad // NB,),
        in_specs=[
            pl.BlockSpec((NB, 4 * H), lambda i: (i, 0)),       # u|v|k|h6
            pl.BlockSpec((NB, K * H), lambda i: (i, 0)),       # u[src] per slot
            pl.BlockSpec((NB, K * 2 * H), lambda i: (i, 0)),   # x3|x5 per slot
            pl.BlockSpec((NB, K), lambda i: (i, 0)),           # validity mask
            pl.BlockSpec(prep["mlp_w1"].shape, lambda i: (0, 0)),
            pl.BlockSpec(prep["mlp_b1"].shape, lambda i: (0, 0)),
            pl.BlockSpec(prep["mlp_w2"].shape, lambda i: (0, 0)),
            pl.BlockSpec(prep["mlp_b2"].shape, lambda i: (0, 0)),
            pl.BlockSpec(prep["gamma"].shape, lambda i: (0, 0)),
            pl.BlockSpec(prep["beta"].shape, lambda i: (0, 0)),
        ],
        out_specs=pl.BlockSpec((NB, H), lambda i: (i, 0)),
        compiler_params=pltpu.CompilerParams(
            dimension_semantics=("parallel",)),
    )(hcat, u_nk, ecat, mask,
      prep["mlp_w1"], prep["mlp_b1"], prep["mlp_w2"], prep["mlp_b2"],
      prep["gamma"], prep["beta"])
    return out[:N]


# ---------------------------------------------------------------------------
# Pure-JAX reference (same bf16 matmul-operand policy -> tight comparison)
# ---------------------------------------------------------------------------
def reference_forward(h0, e_ij, src, dst, params, *, num_heads, eps=1e-5):
    N, H = h0.shape
    prep = prepare_params(params, num_heads)

    def mm(a, b):
        return jnp.dot(a.astype(jnp.bfloat16), b,
                       preferred_element_type=jnp.float32)

    hcat = mm(h0, prep["w_h_cat"])
    u, v, k, h6 = (hcat[:, :H], hcat[:, H:2 * H],
                   hcat[:, 2 * H:3 * H], hcat[:, 3 * H:])
    ecat = mm(e_ij, prep["w_e_cat"])
    x3, x5 = ecat[:, :H], ecat[:, H:]

    attn = u[src] * (v[dst] + x3)                     # scale folded into w1
    amax = jax.ops.segment_max(attn, dst, num_segments=N)
    ex = jnp.exp(attn - amax[dst])
    denom = jax.ops.segment_sum(ex, dst, num_segments=N)
    agg = jax.ops.segment_sum(ex * (k[dst] + x5), dst, num_segments=N)
    h = h6 + agg / jnp.maximum(denom, 1e-30)

    gamma, beta = prep["gamma"], prep["beta"]

    def ln(x):
        mu = x.mean(-1, keepdims=True)
        var = ((x - mu) ** 2).mean(-1, keepdims=True)
        return (x - mu) * jax.lax.rsqrt(var + eps) * gamma + beta

    h = ln(h)
    h1 = jnp.maximum(mm(h, prep["mlp_w1"]) + prep["mlp_b1"], 0.0)
    h = ln(h + mm(h1, prep["mlp_w2"]) + prep["mlp_b2"])
    return h


if __name__ == "__main__":
    # small, deterministic problem: hidden=32, heads=4, N=8 nodes, E=16 edges
    hidden = 32
    num_heads = 4
    N = 8

    # bidirectional ring graph: every node has exactly 2 incoming edges
    src = jnp.array([i for i in range(N)] + [i for i in range(N)],
                    dtype=jnp.int32)
    dst = jnp.array([(i + 1) % N for i in range(N)]
                    + [(i - 1) % N for i in range(N)], dtype=jnp.int32)
    E = int(src.shape[0])

    key = jax.random.PRNGKey(0)
    keys = jax.random.split(key, 12)

    def w(k, out_dim, in_dim):
        return (jax.random.normal(k, (out_dim, in_dim), jnp.float32)
                / math.sqrt(in_dim))

    h0 = jax.random.normal(keys[0], (N, hidden), jnp.float32)
    e_ij = jax.random.normal(keys[1], (E, hidden), jnp.float32)

    params = {
        # w1..w6: nn.Linear(hidden, hidden, bias=False); stored transposed
        "w1t": w(keys[2], hidden, hidden).T,
        "w2t": w(keys[3], hidden, hidden).T,
        "w3t": w(keys[4], hidden, hidden).T,
        "w4t": w(keys[5], hidden, hidden).T,
        "w5t": w(keys[6], hidden, hidden).T,
        "w6t": w(keys[7], hidden, hidden).T,
        # MLP: hidden -> 2*hidden -> hidden, with bias
        "mlp_w1t": w(keys[8], 2 * hidden, hidden).T,
        "mlp_b1": 0.01 * jax.random.normal(keys[9], (1, 2 * hidden), jnp.float32),
        "mlp_w2t": w(keys[10], hidden, 2 * hidden).T,
        "mlp_b2": 0.01 * jax.random.normal(keys[11], (1, hidden), jnp.float32),
        # LayerNorm(hidden): gamma=1, beta=0 (PyTorch default init)
        "gamma": jnp.ones((1, hidden), jnp.float32),
        "beta": jnp.zeros((1, hidden), jnp.float32),
    }

    out = graph_attention_pallas(h0, e_ij, src, dst, params,
                                 num_heads=num_heads)
    out = jax.block_until_ready(out)

    ref = reference_forward(h0, e_ij, src, dst, params, num_heads=num_heads)
    ref = jax.block_until_ready(ref)

    assert out.shape == (N, hidden) and out.dtype == jnp.float32
    max_err = float(jnp.max(jnp.abs(out - ref)))
    assert jnp.allclose(out, ref, atol=2e-3, rtol=2e-3), max_err
    print("KERNEL_OK")
</pallas_src>

<mosaic_0001>
module attributes {stable_mosaic.version = 11 : i64} {
  func.func @_proj_matmul_kernel(%arg0: i32, %arg1: memref<8x32xbf16, #tpu.memory_space<vmem>>, %arg2: memref<32x128xbf16, #tpu.memory_space<vmem>>, %arg3: memref<8x128xf32, #tpu.memory_space<vmem>>) attributes {dimension_semantics = [#tpu.dimension_semantics<parallel>], iteration_bounds = array<i64: 1>, scalar_prefetch = 0 : i64, scratch_operands = 0 : i64, tpu.core_type = #tpu.core_type<tc>, window_params = [{transform_indices = @transform_0, window_bounds = array<i64: 8, 32>}, {pipeline_mode = #tpu.pipeline_mode<synchronous>, transform_indices = @transform_1, window_bounds = array<i64: 32, 128>}, {transform_indices = @transform_2, window_bounds = array<i64: 8, 128>}]} {
    %c0 = arith.constant 0 : index
    %c0_0 = arith.constant 0 : index
    %0 = vector.load %arg1[%c0, %c0_0] : memref<8x32xbf16, #tpu.memory_space<vmem>>, vector<8x32xbf16>
    %c0_1 = arith.constant 0 : index
    %c0_2 = arith.constant 0 : index
    %1 = vector.load %arg2[%c0_1, %c0_2] : memref<32x128xbf16, #tpu.memory_space<vmem>>, vector<32x128xbf16>
    %cst = arith.constant dense<0.000000e+00> : vector<8x128xf32>
    %2 = tpu.matmul %0, %1, %cst {dimension_numbers = #tpu.dot_dimension_numbers<[1], [0], [0], [1], [0, 0, 1, 1], [], []>} : vector<8x32xbf16>, vector<32x128xbf16>, vector<8x128xf32> -> vector<8x128xf32>
    %c0_3 = arith.constant 0 : index
    %c0_4 = arith.constant 0 : index
    %3 = vector.load %arg3[%c0_3, %c0_4] : memref<8x128xf32, #tpu.memory_space<vmem>>, vector<8x128xf32>
    tpu.vector_store %arg3[%c0_3, %c0_4], %2 {strides = array<i32>} : memref<8x128xf32, #tpu.memory_space<vmem>>, vector<8x128xf32>,
    return
  }
  func.func @transform_0(%arg0: i32) -> (i32, i32) {
    %c0_i32 = arith.constant 0 : i32
    %c0_i32_0 = arith.constant 0 : i32
    return %arg0, %c0_i32 : i32, i32
  }
  func.func @transform_1(%arg0: i32) -> (i32, i32) {
    %c0_i32 = arith.constant 0 : i32
    %c0_i32_0 = arith.constant 0 : i32
    %c0_i32_1 = arith.constant 0 : i32
    return %c0_i32, %c0_i32_0 : i32, i32
  }
  func.func @transform_2(%arg0: i32) -> (i32, i32) {
    %c0_i32 = arith.constant 0 : i32
    %c0_i32_0 = arith.constant 0 : i32
    return %arg0, %c0_i32 : i32, i32
  }
}

</mosaic_0001>

<llo_original>
// kernel: tpu_custom_call.1
$region0: #{tpu_custom_call.1}
  #allocation0 [shape = 'u32[]', space=smem, size = 0x4, offset = 0x4, fixed_abs, tag = 'smem constant byte address 0x4 - core index']
  #allocation1 [shape = 'u32[72,128]{1,0:T(1,128)}', space=vmem, size = 0x9000, scoped, tag = 'internal scratch']
  %s0 = inlined_call_operand.hbm [shape: bf16[8,32], index: 0, kind: input, shape index: {}]
  %s1 = inlined_call_operand.hbm [shape: bf16[32,128], index: 1, kind: input, shape index: {}]
  %s2 = inlined_call_operand.hbm [shape: f32[8,128], index: 2, kind: output, shape index: {}]
  %s3 = sld [smem:[#allocation0]]
  $region26: #{tpu_custom_call.1} parent=0
    _
  %s5 = ssub.s32 1, %s3
  %s6 = scalar_select 0, %s5, %s3
  $region1: #{tpu_custom_call.1} parent=0
    #allocation2 [shape = 'u8[2048]{0}', space=vmem, size = 0x800, scoped, tag = 'input window, operand 0, single buffered']
    #allocation3 [shape = 's32[1]{0}', space=sflag, size = 0x4, scoped, tag = 'scoped memory for tpu_custom_call.1']
    #allocation4 [shape = 's32[1]{0}', space=sflag, size = 0x4, scoped, tag = 'scoped memory for tpu_custom_call.1']
    #allocation5 [shape = 'u8[8192]{0}', space=vmem, size = 0x2000, scoped, tag = 'input window, operand 1, single buffered']
    #allocation6 [shape = 's32[1]{0}', space=sflag, size = 0x4, scoped, tag = 'scoped memory for tpu_custom_call.1']
    #allocation7 [shape = 'u8[4096]{0}', space=vmem, size = 0x1000, scoped, tag = 'output window, operand 0, single buffered']
    %7 = vsyncpa [#allocation3], 0
    %8 = vsyncpa [#allocation6], 0
    %9 = vsyncpa [#allocation4], 0
    // Predicated region
    $region2: #{tpu_custom_call.1} parent=1 // pred_check
      _
    $region3: #{tpu_custom_call.1} parent=1 // pred_check_branch
      %11 = sbr.rel (0) target = $region5
    $region4: #{tpu_custom_call.1} parent=1 // pred_region
      %13 = vsyncadd [#allocation3], 0
      %s15 = sshll.u32 %s0, 4
      %s16 = int_to_ptr.hbm [resolvable:$true] %s15
      %s17 = sshll.u32 [#allocation2], 4
      %s18 = int_to_ptr.vmem [resolvable:$true] %s17
      %20 = dma.hbm_to_vmem [thread:$0]  %s16, 64, %s18, [#allocation3]
    $region5: #{tpu_custom_call.1} parent=1 // pred_fallthru
      _
    // Predicated region
    $region6: #{tpu_custom_call.1} parent=1 // pred_check
      _
    $region7: #{tpu_custom_call.1} parent=1 // pred_check_branch
      %22 = sbr.rel (0) target = $region9
    $region8: #{tpu_custom_call.1} parent=1 // pred_region
      %24 = vsyncadd [#allocation6], 0
      %s25 = sshll.u32 %s1, 4
      %s26 = int_to_ptr.hbm [resolvable:$true] %s25
      %s27 = sshll.u32 [#allocation5], 4
      %s28 = int_to_ptr.vmem [resolvable:$true] %s27
      %33 = dma.hbm_to_vmem [thread:$0]  %s26, 256, %s28, [#allocation6], 64, 64, 4
    $region9: #{tpu_custom_call.1} parent=1 // pred_fallthru
      _
    // Predicated region
    $region10: #{tpu_custom_call.1} parent=1 // pred_check
      _
    $region11: #{tpu_custom_call.1} parent=1 // pred_check_branch
      %35 = sbr.rel (0) target = $region13
    $region12: #{tpu_custom_call.1} parent=1 // pred_region
      %37 = dma.done [#allocation3], 64
    $region13: #{tpu_custom_call.1} parent=1 // pred_fallthru
      _
    // Predicated region
    $region14: #{tpu_custom_call.1} parent=1 // pred_check
      _
    $region15: #{tpu_custom_call.1} parent=1 // pred_check_branch
      %39 = sbr.rel (0) target = $region17
    $region16: #{tpu_custom_call.1} parent=1 // pred_region
      %41 = dma.done [#allocation6], 256
    $region17: #{tpu_custom_call.1} parent=1 // pred_fallthru
      _
    %v43 = vld [vmem:[#allocation2] sm:$0xf]
    %v44 = vld [vmem:[#allocation5] sm:$0xf]
    %v45 = vld [vmem:[#allocation5 + $0x4] sm:$0xf]
    %v46 = vld [vmem:[#allocation5 + $0x8] sm:$0xf]
    %v47 = vld [vmem:[#allocation5 + $0xc] sm:$0xf]
    %v52 = vunpack.c.l.b16 %v44
    %v53 = vunpack.c.l.b16 %v45
    %v54 = vunpack.c.l.b16 %v46
    %v55 = vunpack.c.l.b16 %v47
    %v56 = vpack.c.b16 %v53, %v52
    %v57 = vpack.c.b16 %v55, %v54
    %vm60 = vcmask 261120
    %v62 = vsel %vm60, %v43, 0
    %64 = vmatpush.bf16.msra.mxu0 0
    %65 = vmatpush.bf16.msra.mxu0 0
    %66 = vmatpush.bf16.msra.mxu0 0
    %67 = vmatpush.bf16.msra.mxu0 0
    %68 = vmatpush.bf16.msra.mxu0 0
    %69 = vmatpush.bf16.msra.mxu0 0
    %70 = vmatpush.bf16.msra.mxu0 %v57
    %71 = vmatpush.bf16.msra.mxu0 %v56
    %72 = vmatmul.bf16.gmra.mxu0 %v62
    %v73 = vpop.f32.mrf.mxu0
    %v74 = vadd.f32 0.0, %v73
    %v75 = vpop.f32.mrf.mxu0
    %76 = vdwg.mxu0
    %77 = vst [vmem:[#allocation7] sm:$0xff] %v74
    // Predicated region
    $region18: #{tpu_custom_call.1} parent=1 // pred_check
      _
    $region19: #{tpu_custom_call.1} parent=1 // pred_check_branch
      %79 = sbr.rel (0) target = $region21
    $region20: #{tpu_custom_call.1} parent=1 // pred_region
      %81 = vsyncadd [#allocation4], 0
      %s83 = sshll.u32 [#allocation7], 4
      %s84 = int_to_ptr.vmem [resolvable:$true] %s83
      %s85 = sshll.u32 %s2, 4
      %s86 = int_to_ptr.hbm [resolvable:$true] %s85
      %88 = dma.vmem_to_hbm [thread:$0]  %s84, 128, %s86, [#allocation4]
    $region21: #{tpu_custom_call.1} parent=1 // pred_fallthru
      _
    // Predicated region
    $region22: #{tpu_custom_call.1} parent=1 // pred_check
      _
    $region23: #{tpu_custom_call.1} parent=1 // pred_check_branch
      %90 = sbr.rel (0) target = $region25
    $region24: #{tpu_custom_call.1} parent=1 // pred_region
      %92 = dma.done [#allocation4], 128
    $region25: #{tpu_custom_call.1} parent=1 // pred_fallthru
      _
    %93 = vsyncpa [#allocation3], 1
    %94 = vsyncpa [#allocation6], 1
    %95 = vsyncpa [#allocation4], 1

</llo_original>
